<compile_context>
chip_gen: v5e
topology: v5e:2x2
jax: 0.10.0
libtpu: 0.0.40
codegen_flags: <defaults>
</compile_context>

<pallas_src>
import math

import jax
import jax.numpy as jnp
from jax.experimental import pallas as pl
from jax.experimental.pallas import tpu as pltpu

EPS = 1e-5


def stats_kernel(x_ref, gram_ref, sum_ref):
    """Accumulate Gram = sum_m x_m x_m^T (13x13) and channel sums of x."""
    @pl.when(jnp.logical_and(pl.program_id(0) == 0, pl.program_id(1) == 0))
    def _():
        gram_ref[...] = jnp.zeros_like(gram_ref)
        sum_ref[...] = jnp.zeros_like(sum_ref)

    x = x_ref[0]  # (13, T): channels on sublanes, spatial on lanes
    gram_ref[...] += jax.lax.dot_general(
        x, x, dimension_numbers=(((1,), (1,)), ((), ())),
        preferred_element_type=jnp.float32)
    sum_ref[...] += jnp.sum(x, axis=1, keepdims=True)


def apply_kernel(x_ref, w3_ref, b3_ref, w2_ref, b2_ref, out_ref):
    """Fused graph on one (13, T) tile:  out = relu(W3@x + b3) + W2@x + b2."""
    x = x_ref[0]                                         # (13, T)
    relu_in = jnp.dot(w3_ref[...], x, preferred_element_type=jnp.float32) + b3_ref[...]
    lin = jnp.dot(w2_ref[...], x, preferred_element_type=jnp.float32) + b2_ref[...]
    out_ref[0] = jnp.maximum(relu_in, 0.0) + lin


def model_forward(x_nchw, params, tile_hw=2048):
    w1, b1, gamma, beta, wc, bc = params
    N, C, H, W = x_nchw.shape
    assert C == 13
    HW = H * W
    Hp, Wp = H + 2, W + 2

    # Spatial tile (lanes) must be a multiple of 128.
    tile_hw = max(128, (tile_hw // 128) * 128)
    tile = min(tile_hw, pl.cdiv(HW, 128) * 128)
    HW_pad = pl.cdiv(HW, tile) * tile
    num_tiles = HW_pad // tile

    # NCHW -> (N, 13, HW): pure reshape, no transpose, no spatial pad in HBM.
    x3 = x_nchw.reshape(N, C, HW).astype(jnp.float32)
    if HW_pad != HW:
        # extra zero columns contribute nothing to Gram/sums; their outputs are
        # sliced away after pass 2.
        x3 = jnp.pad(x3, ((0, 0), (0, 0), (0, HW_pad - HW)))

    # ---------------- pass 1: global input statistics ----------------
    gram, xsum = pl.pallas_call(
        stats_kernel,
        out_shape=(jax.ShapeDtypeStruct((13, 13), jnp.float32),
                   jax.ShapeDtypeStruct((13, 1), jnp.float32)),
        grid_spec=pltpu.PrefetchScalarGridSpec(
            num_scalar_prefetch=0,
            grid=(N, num_tiles),
            in_specs=[pl.BlockSpec((1, 13, tile), lambda n, t: (n, 0, t))],
            out_specs=(pl.BlockSpec((13, 13), lambda n, t: (0, 0)),
                       pl.BlockSpec((13, 1), lambda n, t: (0, 0)))),
        compiler_params=pltpu.CompilerParams(
            dimension_semantics=("arbitrary", "arbitrary")),
        cost_estimate=pl.CostEstimate(
            flops=2 * 13 * 13 * N * HW_pad,
            transcendentals=0,
            bytes_accessed=4 * N * 13 * HW_pad),
    )(x3)

    # ---------------- host-side (tiny) stats + weight folding ----------------
    W1 = w1.reshape(13, 13).astype(jnp.float32)          # (out, in)
    Wc = wc.reshape(13, 26).astype(jnp.float32)
    Wc_a, Wc_b = Wc[:, :13], Wc[:, 13:]

    Mtot = float(N * Hp * Wp)                            # includes conv pad border
    sx = xsum[:, 0]                                      # (13,)
    w1sx = W1 @ sx
    mean = w1sx / Mtot + b1
    quad = jnp.sum((W1 @ gram) * W1, axis=1)             # w1_c^T G w1_c
    sumsq = quad + 2.0 * b1 * w1sx + Mtot * b1 * b1      # border adds Mborder*b1^2
    var = sumsq / Mtot - mean * mean                     # biased, like BN training
    s = gamma * jax.lax.rsqrt(var + EPS)
    t = beta - mean * s

    # Fold BN affine + concat-conv:  v6 = relu(W3@x + b3) + W2@x + b2
    W_eff = Wc_a + Wc_b * s[None, :]
    b_eff = Wc_b @ t + bc
    W3 = W1 * s[:, None]
    b3 = s * b1 + t
    W2 = W_eff @ W1
    b2 = W_eff @ b1 + b_eff
    border_val = jnp.maximum(b3, 0.0) + b2               # output on the zero-pad border

    # ---------------- pass 2: fused apply over interior tiles ----------------
    out_flat = pl.pallas_call(
        apply_kernel,
        out_shape=jax.ShapeDtypeStruct((N, 13, HW_pad), jnp.float32),
        grid_spec=pltpu.PrefetchScalarGridSpec(
            num_scalar_prefetch=0,
            grid=(N, num_tiles),
            in_specs=[
                pl.BlockSpec((1, 13, tile), lambda n, t: (n, 0, t)),
                pl.BlockSpec((13, 13), lambda n, t: (0, 0)),
                pl.BlockSpec((13, 1), lambda n, t: (0, 0)),
                pl.BlockSpec((13, 13), lambda n, t: (0, 0)),
                pl.BlockSpec((13, 1), lambda n, t: (0, 0)),
            ],
            out_specs=pl.BlockSpec((1, 13, tile), lambda n, t: (n, 0, t))),
        compiler_params=pltpu.CompilerParams(
            dimension_semantics=("parallel", "parallel")),
        cost_estimate=pl.CostEstimate(
            flops=2 * 2 * 13 * 13 * N * HW_pad,
            transcendentals=0,
            bytes_accessed=2 * 4 * N * 13 * HW_pad),
    )(x3, W3, b3.reshape(13, 1), W2, b2.reshape(13, 1))

    # ---------------- assemble padded output (constant border) ----------------
    interior = out_flat[:, :, :HW].reshape(N, 13, H, W)
    out_full = jnp.broadcast_to(border_val.reshape(1, 13, 1, 1), (N, 13, Hp, Wp))
    out_full = jax.lax.dynamic_update_slice(out_full, interior, (0, 0, 1, 1))
    return out_full


def reference_forward(x_nchw, params):
    """Plain-JAX reference mirroring the PyTorch graph (for correctness check)."""
    w1, b1, gamma, beta, wc, bc = params
    xp = jnp.pad(x_nchw, ((0, 0), (0, 0), (1, 1), (1, 1)))
    v1 = jnp.einsum('oc,nchw->nohw', w1.reshape(13, 13), xp) + b1[None, :, None, None]
    mean = v1.mean(axis=(0, 2, 3), keepdims=True)
    var = ((v1 - mean) ** 2).mean(axis=(0, 2, 3), keepdims=True)   # biased, like BN training
    v2 = ((v1 - mean) * jax.lax.rsqrt(var + EPS)
          * gamma[None, :, None, None] + beta[None, :, None, None])
    v3 = jnp.concatenate([v1, v2], axis=1)
    v4 = jnp.einsum('oc,nchw->nohw', wc.reshape(13, 26), v3) + bc[None, :, None, None]
    return jnp.maximum(v2, 0.0) + v4


def init_params(key):
    k1, k2, k3, k4 = jax.random.split(key, 4)
    # conv: Conv2d(13, 13, 1) -- PyTorch-style uniform init
    bound1 = 1.0 / math.sqrt(13 * 1 * 1)
    w1 = jax.random.uniform(k1, (13, 13, 1, 1), jnp.float32, -bound1, bound1)
    b1 = jax.random.uniform(k2, (13,), jnp.float32, -bound1, bound1)
    # bn: BatchNorm2d(13) default affine init
    gamma = jnp.ones((13,), jnp.float32)
    beta = jnp.zeros((13,), jnp.float32)
    # conv_: 1x1 conv on 26 channels -> 13 channels (see TODO above)
    bound2 = 1.0 / math.sqrt(26 * 1 * 1)
    wc = jax.random.uniform(k3, (13, 26, 1, 1), jnp.float32, -bound2, bound2)
    bc = jax.random.uniform(k4, (13,), jnp.float32, -bound2, bound2)
    return (w1, b1, gamma, beta, wc, bc)


if __name__ == "__main__":
    key = jax.random.PRNGKey(0)
    kp, kx = jax.random.split(key)
    params = init_params(kp)

    # small shapes consistent with the module (13 channels required by weights)
    x = jax.random.normal(kx, (2, 13, 16, 16), dtype=jnp.float32)

    # tile_hw=128 -> grid (N=2, tiles=2): exercises multi-tile accumulation.
    fwd = jax.jit(lambda xx: model_forward(xx, params, tile_hw=128))
    out = jax.block_until_ready(fwd(x))

    ref = jax.block_until_ready(reference_forward(x, params))
    assert out.shape == (2, 13, 18, 18), out.shape
    max_err = float(jnp.max(jnp.abs(out - ref)))
    assert jnp.allclose(out, ref, atol=1e-4, rtol=1e-4), max_err

    print("KERNEL_OK")
</pallas_src>

<mosaic_0001>
module attributes {stable_mosaic.version = 11 : i64} {
  func.func @stats_kernel(%arg0: i32, %arg1: i32, %arg2: memref<1x13x128xf32, #tpu.memory_space<vmem>>, %arg3: memref<13x13xf32, #tpu.memory_space<vmem>>, %arg4: memref<13x1xf32, #tpu.memory_space<vmem>>) attributes {dimension_semantics = [#tpu.dimension_semantics<arbitrary>, #tpu.dimension_semantics<arbitrary>], iteration_bounds = array<i64: 2, 2>, scalar_prefetch = 0 : i64, scratch_operands = 0 : i64, tpu.core_type = #tpu.core_type<tc>, window_params = [{transform_indices = @transform_0, window_bounds = array<i64: 1, 13, 128>}, {pipeline_mode = #tpu.pipeline_mode<synchronous>, transform_indices = @transform_1, window_bounds = array<i64: 13, 13>}, {pipeline_mode = #tpu.pipeline_mode<synchronous>, transform_indices = @transform_2, window_bounds = array<i64: 13, 1>}]} {
    %c0_i32 = arith.constant 0 : i32
    %0 = arith.cmpi eq, %arg0, %c0_i32 : i32
    %c0_i32_0 = arith.constant 0 : i32
    %1 = arith.cmpi eq, %arg1, %c0_i32_0 : i32
    %2 = arith.andi %0, %1 : i1
    %3 = arith.extui %2 : i1 to i32
    %c0_i32_1 = arith.constant 0 : i32
    %4 = arith.cmpi ne, %3, %c0_i32_1 : i32
    scf.if %4 {
      %cst_13 = arith.constant 0.000000e+00 : f32
      %16 = vector.broadcast %cst_13 : f32 to vector<13x13xf32>
      %c0_14 = arith.constant 0 : index
      %c0_15 = arith.constant 0 : index
      %17 = vector.load %arg3[%c0_14, %c0_15] : memref<13x13xf32, #tpu.memory_space<vmem>>, vector<13x13xf32>
      tpu.vector_store %arg3[%c0_14, %c0_15], %16 {strides = array<i32>} : memref<13x13xf32, #tpu.memory_space<vmem>>, vector<13x13xf32>,
      %cst_16 = arith.constant 0.000000e+00 : f32
      %18 = vector.broadcast %cst_16 : f32 to vector<13x1xf32>
      %c0_17 = arith.constant 0 : index
      %c0_18 = arith.constant 0 : index
      %19 = vector.load %arg4[%c0_17, %c0_18] : memref<13x1xf32, #tpu.memory_space<vmem>>, vector<13x1xf32>
      tpu.vector_store %arg4[%c0_17, %c0_18], %18 {strides = array<i32>} : memref<13x1xf32, #tpu.memory_space<vmem>>, vector<13x1xf32>,
    } else {
    }
    %c0 = arith.constant 0 : index
    %c0_2 = arith.constant 0 : index
    %c0_3 = arith.constant 0 : index
    %5 = vector.load %arg2[%c0, %c0_2, %c0_3] : memref<1x13x128xf32, #tpu.memory_space<vmem>>, vector<1x13x128xf32>
    %6 = vector.shape_cast %5 : vector<1x13x128xf32> to vector<13x128xf32>
    %c0_4 = arith.constant 0 : index
    %c0_5 = arith.constant 0 : index
    %7 = vector.load %arg3[%c0_4, %c0_5] : memref<13x13xf32, #tpu.memory_space<vmem>>, vector<13x13xf32>
    %cst = arith.constant dense<0.000000e+00> : vector<13x13xf32>
    %8 = tpu.matmul %6, %6, %cst {dimension_numbers = #tpu.dot_dimension_numbers<[1], [1], [0], [0], [0, 0, 1, 0], [], []>} : vector<13x128xf32>, vector<13x128xf32>, vector<13x13xf32> -> vector<13x13xf32>
    %9 = arith.addf %7, %8 : vector<13x13xf32>
    %c0_6 = arith.constant 0 : index
    %c0_7 = arith.constant 0 : index
    %10 = vector.load %arg3[%c0_6, %c0_7] : memref<13x13xf32, #tpu.memory_space<vmem>>, vector<13x13xf32>
    tpu.vector_store %arg3[%c0_6, %c0_7], %9 {strides = array<i32>} : memref<13x13xf32, #tpu.memory_space<vmem>>, vector<13x13xf32>,
    %c0_8 = arith.constant 0 : index
    %c0_9 = arith.constant 0 : index
    %11 = vector.load %arg4[%c0_8, %c0_9] : memref<13x1xf32, #tpu.memory_space<vmem>>, vector<13x1xf32>
    %cst_10 = arith.constant dense<0.000000e+00> : vector<13xf32>
    %12 = vector.multi_reduction <add>, %6, %cst_10 [1] : vector<13x128xf32> to vector<13xf32>
    %13 = vector.shape_cast %12 : vector<13xf32> to vector<13x1xf32>
    %14 = arith.addf %11, %13 : vector<13x1xf32>
    %c0_11 = arith.constant 0 : index
    %c0_12 = arith.constant 0 : index
    %15 = vector.load %arg4[%c0_11, %c0_12] : memref<13x1xf32, #tpu.memory_space<vmem>>, vector<13x1xf32>
    tpu.vector_store %arg4[%c0_11, %c0_12], %14 {strides = array<i32>} : memref<13x1xf32, #tpu.memory_space<vmem>>, vector<13x1xf32>,
    return
  }
  func.func @transform_0(%arg0: i32, %arg1: i32) -> (i32, i32, i32) {
    %c0_i32 = arith.constant 0 : i32
    %c0_i32_0 = arith.constant 0 : i32
    return %arg0, %c0_i32, %arg1 : i32, i32, i32
  }
  func.func @transform_1(%arg0: i32, %arg1: i32) -> (i32, i32) {
    %c0_i32 = arith.constant 0 : i32
    %c0_i32_0 = arith.constant 0 : i32
    %c0_i32_1 = arith.constant 0 : i32
    return %c0_i32, %c0_i32_0 : i32, i32
  }
  func.func @transform_2(%arg0: i32, %arg1: i32) -> (i32, i32) {
    %c0_i32 = arith.constant 0 : i32
    %c0_i32_0 = arith.constant 0 : i32
    %c0_i32_1 = arith.constant 0 : i32
    return %c0_i32, %c0_i32_0 : i32, i32
  }
}

module attributes {stable_mosaic.version = 11 : i64} {
  func.func @apply_kernel(%arg0: i32, %arg1: i32, %arg2: memref<1x13x128xf32, #tpu.memory_space<vmem>>, %arg3: memref<13x13xf32, #tpu.memory_space<vmem>>, %arg4: memref<13x1xf32, #tpu.memory_space<vmem>>, %arg5: memref<13x13xf32, #tpu.memory_space<vmem>>, %arg6: memref<13x1xf32, #tpu.memory_space<vmem>>, %arg7: memref<1x13x128xf32, #tpu.memory_space<vmem>>) attributes {dimension_semantics = [#tpu.dimension_semantics<parallel>, #tpu.dimension_semantics<parallel>], iteration_bounds = array<i64: 2, 2>, scalar_prefetch = 0 : i64, scratch_operands = 0 : i64, tpu.core_type = #tpu.core_type<tc>, window_params = [{transform_indices = @transform_0, window_bounds = array<i64: 1, 13, 128>}, {pipeline_mode = #tpu.pipeline_mode<synchronous>, transform_indices = @transform_1, window_bounds = array<i64: 13, 13>}, {pipeline_mode = #tpu.pipeline_mode<synchronous>, transform_indices = @transform_2, window_bounds = array<i64: 13, 1>}, {pipeline_mode = #tpu.pipeline_mode<synchronous>, transform_indices = @transform_3, window_bounds = array<i64: 13, 13>}, {pipeline_mode = #tpu.pipeline_mode<synchronous>, transform_indices = @transform_4, window_bounds = array<i64: 13, 1>}, {transform_indices = @transform_5, window_bounds = array<i64: 1, 13, 128>}]} {
    %c0 = arith.constant 0 : index
    %c0_0 = arith.constant 0 : index
    %c0_1 = arith.constant 0 : index
    %0 = vector.load %arg2[%c0, %c0_0, %c0_1] : memref<1x13x128xf32, #tpu.memory_space<vmem>>, vector<1x13x128xf32>
    %1 = vector.shape_cast %0 : vector<1x13x128xf32> to vector<13x128xf32>
    %c0_2 = arith.constant 0 : index
    %c0_3 = arith.constant 0 : index
    %2 = vector.load %arg3[%c0_2, %c0_3] : memref<13x13xf32, #tpu.memory_space<vmem>>, vector<13x13xf32>
    %cst = arith.constant dense<0.000000e+00> : vector<13x128xf32>
    %3 = tpu.matmul %2, %1, %cst {dimension_numbers = #tpu.dot_dimension_numbers<[1], [0], [0], [1], [0, 0, 1, 1], [], []>} : vector<13x13xf32>, vector<13x128xf32>, vector<13x128xf32> -> vector<13x128xf32>
    %c0_4 = arith.constant 0 : index
    %c0_5 = arith.constant 0 : index
    %4 = vector.load %arg4[%c0_4, %c0_5] : memref<13x1xf32, #tpu.memory_space<vmem>>, vector<13x1xf32>
    %5 = vector.broadcast %4 : vector<13x1xf32> to vector<13x128xf32>
    %6 = arith.addf %3, %5 : vector<13x128xf32>
    %c0_6 = arith.constant 0 : index
    %c0_7 = arith.constant 0 : index
    %7 = vector.load %arg5[%c0_6, %c0_7] : memref<13x13xf32, #tpu.memory_space<vmem>>, vector<13x13xf32>
    %cst_8 = arith.constant dense<0.000000e+00> : vector<13x128xf32>
    %8 = tpu.matmul %7, %1, %cst_8 {dimension_numbers = #tpu.dot_dimension_numbers<[1], [0], [0], [1], [0, 0, 1, 1], [], []>} : vector<13x13xf32>, vector<13x128xf32>, vector<13x128xf32> -> vector<13x128xf32>
    %c0_9 = arith.constant 0 : index
    %c0_10 = arith.constant 0 : index
    %9 = vector.load %arg6[%c0_9, %c0_10] : memref<13x1xf32, #tpu.memory_space<vmem>>, vector<13x1xf32>
    %10 = vector.broadcast %9 : vector<13x1xf32> to vector<13x128xf32>
    %11 = arith.addf %8, %10 : vector<13x128xf32>
    %cst_11 = arith.constant 0.000000e+00 : f32
    %12 = vector.broadcast %cst_11 : f32 to vector<13x128xf32>
    %13 = arith.maximumf %6, %12 : vector<13x128xf32>
    %14 = arith.addf %13, %11 : vector<13x128xf32>
    %c0_12 = arith.constant 0 : index
    %c0_13 = arith.constant 0 : index
    %c0_14 = arith.constant 0 : index
    %15 = vector.load %arg7[%c0_12, %c0_13, %c0_14] : memref<1x13x128xf32, #tpu.memory_space<vmem>>, vector<1x13x128xf32>
    %16 = vector.shape_cast %15 : vector<1x13x128xf32> to vector<13x128xf32>
    %17 = vector.shape_cast %14 : vector<13x128xf32> to vector<1x13x128xf32>
    tpu.vector_store %arg7[%c0_12, %c0_13, %c0_14], %17 {strides = array<i32>} : memref<1x13x128xf32, #tpu.memory_space<vmem>>, vector<1x13x128xf32>,
    return
  }
  func.func @transform_0(%arg0: i32, %arg1: i32) -> (i32, i32, i32) {
    %c0_i32 = arith.constant 0 : i32
    %c0_i32_0 = arith.constant 0 : i32
    return %arg0, %c0_i32, %arg1 : i32, i32, i32
  }
  func.func @transform_1(%arg0: i32, %arg1: i32) -> (i32, i32) {
    %c0_i32 = arith.constant 0 : i32
    %c0_i32_0 = arith.constant 0 : i32
    %c0_i32_1 = arith.constant 0 : i32
    return %c0_i32, %c0_i32_0 : i32, i32
  }
  func.func @transform_2(%arg0: i32, %arg1: i32) -> (i32, i32) {
    %c0_i32 = arith.constant 0 : i32
    %c0_i32_0 = arith.constant 0 : i32
    %c0_i32_1 = arith.constant 0 : i32
    return %c0_i32, %c0_i32_0 : i32, i32
  }
  func.func @transform_3(%arg0: i32, %arg1: i32) -> (i32, i32) {
    %c0_i32 = arith.constant 0 : i32
    %c0_i32_0 = arith.constant 0 : i32
    %c0_i32_1 = arith.constant 0 : i32
    return %c0_i32, %c0_i32_0 : i32, i32
  }
  func.func @transform_4(%arg0: i32, %arg1: i32) -> (i32, i32) {
    %c0_i32 = arith.constant 0 : i32
    %c0_i32_0 = arith.constant 0 : i32
    %c0_i32_1 = arith.constant 0 : i32
    return %c0_i32, %c0_i32_0 : i32, i32
  }
  func.func @transform_5(%arg0: i32, %arg1: i32) -> (i32, i32, i32) {
    %c0_i32 = arith.constant 0 : i32
    %c0_i32_0 = arith.constant 0 : i32
    return %arg0, %c0_i32, %arg1 : i32, i32, i32
  }
}

</mosaic_0001>

<llo_original>
// kernel: _lambda_.2
$region0: #{_lambda_.2}
  #allocation0 [shape = 'u32[]', space=smem, size = 0x4, offset = 0x4, fixed_abs, tag = 'smem constant byte address 0x4 - core index']
  #allocation1 [shape = 'u32[72,128]{1,0:T(1,128)}', space=vmem, size = 0x9000, scoped, tag = 'internal scratch']
  %s0 = inlined_call_operand.vmem [shape: f32[2,13,256], index: 0, kind: input, shape index: {}]
  %s1 = inlined_call_operand.vmem [shape: f32[13,13], index: 1, kind: output, shape index: {0}]
  %s2 = inlined_call_operand.vmem [shape: f32[13,1], index: 2, kind: output, shape index: {1}]
  %3 = xla_tuple %s1, %s2
  %s4 = sld [smem:[#allocation0]]
  $region87: #{_lambda_.2} parent=0
    _
  %s6 = ssub.s32 1, %s4
  %s7 = scalar_select 0, %s6, %s4
  $region1: #{_lambda_.2} parent=0
    #allocation2 [shape = 'u8[16384]{0}', space=vmem, size = 0x4000, scoped, tag = 'input window, operand 0']
    loop: start=0, step=1, limit=6
    $region2: #{_lambda_.2} parent=1 // loop_pre_header
      _
    $region3: #{_lambda_.2} parent=1 // loop_header
      %s9 = sphi 0, %s13
      %p10 = scmp.ge.s32.totalorder %s9, 6
      %s16 = sphi 0, %s28
      %s17 = sphi 0, %s24
      %s18 = sphi 0, %s16
      %s19 = sphi 0, %s17
      %s20 = sphi 0, %s18
      %s21 = sphi 0, %s19
      %s33 = sphi 0, %s35
      %s36 = sphi 0, %s33
      %s37 = sphi 0, %s36
      %s53 = sphi 0, %s37
      %s57 = sphi 0, %s57
      %s59 = sphi 0, %s57
      %s60 = sphi 0, %s59
      %s74 = sphi 0, %s60
      %s78 = sphi 0, %s78
      %s80 = sphi 0, %s78
      %s81 = sphi 0, %s80
      %s95 = sphi 0, %s81
    $region4: #{_lambda_.2} parent=1 // loop_header_branch
      %12 = sbr.rel (%p10) target = $region8
    $region5: #{_lambda_.2} parent=1 // loop_body
      %s14 = ssub.s32 %s9, 1
      %s15 = ssub.s32 %s9, 2
      %s22 = sadd.s32 1, %s17
      %p23 = scmp.ge.s32.totalorder %s22, 2
      %s24 = scalar_select %p23, 0, %s22
      %s25 = sadd.s32 1, %s16
      %s26 = scalar_select %p23, %s25, %s16
      %p27 = scmp.ge.s32.totalorder %s26, 2
      %s28 = scalar_select %p27, 0, %s26
      %s29 = ssub.s32 %s16, %s28
      %s30 = ssub.s32 %s17, %s24
      %s31 = sor.u32 %s29, %s30
      %p32 = scmp.eq.s32.totalorder %s31, 0
      %s34 = sadd.s32 %s33, 1
      %s35 = scalar_select %p32, %s33, %s34
      %p38 = pneg %p32
      %p39 = scmp.eq.s32.totalorder %s9, 3
      %p40 = por %p38, %p39
      %p41 = scmp.ne.s32.totalorder %s33, %s36
      %p42 = scmp.eq.s32.totalorder %s9, 0
      %p43 = por %p41, %p42
      %p44 = scmp.ne.s32.totalorder %s33, %s36
      %p45 = scmp.eq.s32.totalorder %s14, 3
      %p46 = por %p44, %p45
      %p47 = scmp.ne.s32.totalorder %s36, %s37
      %p48 = scmp.eq.s32.totalorder %s14, 0
      %p49 = por %p47, %p48
      %p50 = scmp.ne.s32.totalorder %s36, %s37
      %p51 = scmp.eq.s32.totalorder %s15, 3
      %p52 = por %p50, %p51
      %p54 = scmp.ne.s32.totalorder %s37, %s53
      %p55 = scmp.eq.s32.totalorder %s15, 0
      %p56 = por %p54, %p55
      %s58 = sadd.s32 %s57, 1
      %p61 = scmp.eq.s32.totalorder %s9, 3
      %p62 = scmp.ne.s32.totalorder %s57, %s59
      %p63 = scmp.eq.s32.totalorder %s9, 0
      %p64 = por %p62, %p63
      %p65 = scmp.ne.s32.totalorder %s57, %s59
      %p66 = scmp.eq.s32.totalorder %s14, 3
      %p67 = por %p65, %p66
      %p68 = scmp.ne.s32.totalorder %s59, %s60
      %p69 = scmp.eq.s32.totalorder %s14, 0
      %p70 = por %p68, %p69
      %p71 = scmp.ne.s32.totalorder %s59, %s60
      %p72 = scmp.eq.s32.totalorder %s15, 3
      %p73 = por %p71, %p72
      %p75 = scmp.ne.s32.totalorder %s60, %s74
      %p76 = scmp.eq.s32.totalorder %s15, 0
      %p77 = por %p75, %p76
      %s79 = sadd.s32 %s78, 1
      %p82 = scmp.eq.s32.totalorder %s9, 3
      %p83 = scmp.ne.s32.totalorder %s78, %s80
      %p84 = scmp.eq.s32.totalorder %s9, 0
      %p85 = por %p83, %p84
      %p86 = scmp.ne.s32.totalorder %s78, %s80
      %p87 = scmp.eq.s32.totalorder %s14, 3
      %p88 = por %p86, %p87
      %p89 = scmp.ne.s32.totalorder %s80, %s81
      %p90 = scmp.eq.s32.totalorder %s14, 0
      %p91 = por %p89, %p90
      %p92 = scmp.ne.s32.totalorder %s80, %s81
      %p93 = scmp.eq.s32.totalorder %s15, 3
      %p94 = por %p92, %p93
      %p96 = scmp.ne.s32.totalorder %s81, %s95
      %p97 = scmp.eq.s32.totalorder %s15, 0
      %p98 = por %p96, %p97
      %p99 = scmp.le.s32.totalorder 1, %s9
      %p100 = scmp.lt.s32.totalorder %s9, 5
      %p101 = pnand %p99, %p100
      %p102 = pneg %p101
      // Predicated region
      $region9: #{_lambda_.2} parent=5 // pred_check
        _
      $region10: #{_lambda_.2} parent=5 // pred_check_branch
        %104 = sbr.rel (%p101) target = $region12
      $region11: #{_lambda_.2} parent=5 // pred_region
        %s105 = ssub.s32 %s9, 1
      $region12: #{_lambda_.2} parent=5 // pred_fallthru
        _
      %p106 = scmp.lt.s32.totalorder %s9, 4
      // Predicated region
      $region13: #{_lambda_.2} parent=5 // pred_check
        %p107 = pneg %p106
      $region14: #{_lambda_.2} parent=5 // pred_check_branch
        %109 = sbr.rel (%p107) target = $region16
      $region15: #{_lambda_.2} parent=5 // pred_region
        // Predicated region
        $region17: #{_lambda_.2} parent=15 // pred_check
          %p110 = pneg %p43
        $region18: #{_lambda_.2} parent=15 // pred_check_branch
          %112 = sbr.rel (%p110) target = $region20
        $region19: #{_lambda_.2} parent=15 // pred_region
          %s113 = sand.u32 %s33, 1
          %s114 = sand.u32 %s33, 1
          %s115 = smul.addr %s114, 16
          %s116 = scalar_lea.vmem [#allocation2], %s115
          %s117 = smul.addr %s16, 4
          %s118 = sadd.s32 %s17, %s117
          %s119 = smul.addr %s118, 8
          %s120 = scalar_lea.vmem %s0, %s119
          // Predicated region
          $region21: #{_lambda_.2} parent=19 // pred_check
            _
          $region22: #{_lambda_.2} parent=19 // pred_check_branch
            %122 = sbr.rel (0) target = $region24
          $region23: #{_lambda_.2} parent=19 // pred_region
            // Predicated region
            $region25: #{_lambda_.2} parent=23 // pred_check
              _
            $region26: #{_lambda_.2} parent=23 // pred_check_branch
              %124 = sbr.rel (0) target = $region28
            $region27: #{_lambda_.2} parent=23 // pred_region
              // Predicated region
              $region40: #{_lambda_.2} parent=27 // pred_check
                _
              $region41: #{_lambda_.2} parent=27 // pred_check_branch
                %142 = sbr.rel (0) target = $region43
              $region42: #{_lambda_.2} parent=27 // pred_region
                loop: start=0, step=1, limit=1
                $region44: #{_lambda_.2} parent=42 // loop_pre_header
                  _
                $region45: #{_lambda_.2} parent=42 // loop_header
                  %s144 = sphi 0, %s148
                  %p145 = scmp.ge.s32.totalorder %s144, 1
                  %s149 = sphi %s120, %s120
                  %s150 = sphi %s116, %s116
                $region46: #{_lambda_.2} parent=42 // loop_header_branch
                  %147 = sbr.rel (%p145) target = $region50
                $region47: #{_lambda_.2} parent=42 // loop_body
                  %v151 = vld [vmem:[%s149] sm:$0xff]
                  %152 = vst [vmem:[%s150] sm:$0xff] %v151
                  %v153 = vld [vmem:[%s149 + $0x10] sm:$0xff]
                  %154 = vst [vmem:[%s150 + $0x8] sm:$0xff] %v153
                $region48: #{_lambda_.2} parent=42 // loop_footer
                  %s148 = sadd.s32 1, %s144
                $region49: #{_lambda_.2} parent=42 // loop_footer_branch
                  %143 = sbr.rel target = $region45
                $region50: #{_lambda_.2} parent=42 // loop_exit
                  _
              $region43: #{_lambda_.2} parent=27 // pred_fallthru
                _
              // Predicated region
              $region51: #{_lambda_.2} parent=27 // pred_check
                _
              $region52: #{_lambda_.2} parent=27 // pred_check_branch
                %156 = sbr.rel target = $region54
              $region53: #{_lambda_.2} parent=27 // pred_region
                _
              $region54: #{_lambda_.2} parent=27 // pred_fallthru
                _
            $region28: #{_lambda_.2} parent=23 // pred_fallthru
              _
            // Predicated region
            $region29: #{_lambda_.2} parent=23 // pred_check
              _
            $region30: #{_lambda_.2} parent=23 // pred_check_branch
              %126 = sbr.rel target = $region32
            $region31: #{_lambda_.2} parent=23 // pred_region
              %s128 = ssub.s32 256, 1
              loop: start=0, step=1, limit=1
              $region33: #{_lambda_.2} parent=31 // loop_pre_header
                _
              $region34: #{_lambda_.2} parent=31 // loop_header
                %s130 = sphi 0, %s134
                %p131 = scmp.ge.s32.totalorder %s130, 1
                %s135 = sphi %s120, %s120
                %s136 = sphi %s116, %s116
              $region35: #{_lambda_.2} parent=31 // loop_header_branch
                %133 = sbr.rel (%p131) target = $region39
              $region36: #{_lambda_.2} parent=31 // loop_body
                %v137 = vld [vmem:[%s135] sm:%s128]
                %138 = vst [vmem:[%s136] sm:%s128] %v137
                %v139 = vld [vmem:[%s135 + $0x10] sm:%s128]
                %140 = vst [vmem:[%s136 + $0x8] sm:%s128] %v139
              $region37: #{_lambda_.2} parent=31 // loop_footer
                %s134 = sadd.s32 1, %s130
              $region38: #{_lambda_.2} parent=31 // loop_footer_branch
                %129 = sbr.rel target = $region34
              $region39: #{_lambda_.2} parent=31 // loop_exit
                _
            $region32: #{_lambda_.2} parent=23 // pred_fallthru
              _
          $region24: #{_lambda_.2} parent=19 // pred_fallthru
            _
          %157 = vnop
        $region20: #{_lambda_.2} parent=15 // pred_fallthru
          _
      $region16: #{_lambda_.2} parent=5 // pred_fallthru
        _
      %p158 = scmp.le.s32.totalorder 1, %s9
      %p159 = scmp.lt.s32.totalorder %s9, 5
      %p160 = pnand %p158, %p159
      %p161 = pneg %p160
      // Predicated region
      $region55: #{_lambda_.2} parent=5 // pred_check
        _
      $region56: #{_lambda_.2} parent=5 // pred_check_branch
        %163 = sbr.rel (%p160) target = $region58
      $region57: #{_lambda_.2} parent=5 // pred_region
        %s164 = ssub.s32 %s9, 1
        %s165 = sand.u32 %s36, 1
        %s166 = sand.u32 %s36, 1
        %s167 = smul.addr %s166, 16
        %s168 = scalar_lea.vmem [#allocation2], %s167
        // Predicated region
        $region59: #{_lambda_.2} parent=57 // pred_check
          %p169 = pneg %p49
        $region60: #{_lambda_.2} parent=57 // pred_check_branch
          %171 = sbr.rel (%p169) target = $region62
        $region61: #{_lambda_.2} parent=57 // pred_region
          _
        $region62: #{_lambda_.2} parent=57 // pred_fallthru
          _
        %s172 = sand.u32 %s36, 1
        %s173 = sand.u32 %s36, 1
        %s174 = smul.addr %s173, 16
        %s175 = scalar_lea.vmem [#allocation2], %s174
        %p176 = pneg %p49
        %p177 = pneg %p46
        %p178 = pneg %p70
        %p179 = pneg %p67
        %p180 = pneg %p91
        %p181 = pneg %p88
        %p182 = scmp.eq.s32.totalorder %s18, 0
        %p183 = scmp.eq.s32.totalorder %s19, 0
        %p184 = pnand %p182, %p183
        %p185 = pneg %p184
        // Predicated region
        $region63: #{_lambda_.2} parent=57 // pred_check
          _
        $region64: #{_lambda_.2} parent=57 // pred_check_branch
          %187 = sbr.rel (%p184) target = $region66
        $region65: #{_lambda_.2} parent=57 // pred_region
          %vm188 = vcmask 105472
          %189 = vst.msk [vmem:[%s1] sm:$0xff] %vm188, 0.0
          %vm190 = vcmask 102400
          %191 = vst.msk [vmem:[%s1 + $0x8] sm:$0x1f] %vm190, 0.0
          %vm192 = vcmask 7168
          %193 = vst.msk [vmem:[%s2] sm:$0xff] %vm192, 0.0
          %vm194 = vcmask 4096
          %195 = vst.msk [vmem:[%s2 + $0x8] sm:$0x1f] %vm194, 0.0
        $region66: #{_lambda_.2} parent=57 // pred_fallthru
          _
        %v196 = vld [vmem:[%s168] sm:$0xff]
        %v197 = vld [vmem:[%s168 + $0x8] sm:$0x1f]
        %v198 = vld [vmem:[%s1] sm:$0xff]
        %v199 = vld [vmem:[%s1 + $0x8] sm:$0x1f]
        %200 = vmatpush.xpose.msra.mxu0 0.0
        %201 = vmatpush.xpose.msra.mxu0 0.0
        %202 = vmatpush.xpose.msra.mxu0 0.0
        %203 = vmatpush.xpose.msra.mxu0 0.0
        %204 = vmatpush.xpose.msra.mxu0 0.0
        %205 = vmatpush.xpose.msra.mxu0 0.0
        %206 = vmatpush.xpose.msra.mxu0 0.0
        %207 = vmatpush.xpose.msra.mxu0 0.0
        %208 = vmatpush.xpose.msra.mxu0 0.0
        %209 = vmatpush.xpose.msra.mxu0 0.0
        %210 = vmatpush.xpose.msra.mxu0 0.0
        %211 = vmatpush.xpose.msra.mxu0 0.0
        %212 = vmatpush.xpose.msra.mxu0 0.0
        %213 = vmatpush.xpose.msra.mxu0 0.0
        %214 = vmatpush.xpose.msra.mxu0 %v197
        %215 = vmatpush.xpose.msra.mxu0 %v196
        %216 = vmatmul.f32.gmra.mxu0 %v196
        %v217 = vpop.f32.mrf.mxu0
        %v218 = vadd.f32 0.0, %v217
        %219 = vmatmul.f32.gmra.mxu0 %v197
        %v220 = vpop.f32.mrf.mxu0
        %v221 = vadd.f32 0.0, %v220
        %222 = vdwg.mxu0
        %v223 = vadd.f32 %v198, %v218
        %v224 = vadd.f32 %v199, %v221
        %vm225 = vcmask 105472
        %226 = vst.msk [vmem:[%s1] sm:$0xff] %vm225, %v223
        %vm227 = vcmask 102400
        %228 = vst.msk [vmem:[%s1 + $0x8] sm:$0x1f] %vm227, %v224
        %v229 = vld [vmem:[%s2] sm:$0xff]
        %v230 = vld [vmem:[%s2 + $0x8] sm:$0x1f]
        %231 = vadd.xlane.f32.xlu0 %v196
        %v232 = vpop.xlane.xlu0 %231
        %vm233 = vcmask 1044480
        %v234 = vsel %vm233, %v197, 0.0
        %235 = vadd.xlane.f32.xlu0 %v234
        %v236 = vpop.xlane.xlu0 %235
        %v237 = vadd.f32 %v229, %v232
        %v238 = vadd.f32 %v230, %v236
        %vm239 = vcmask 7168
        %240 = vst.msk [vmem:[%s2] sm:$0xff] %vm239, %v237
        %vm241 = vcmask 4096
        %242 = vst.msk [vmem:[%s2 + $0x8] sm:$0x1f] %vm241, %v238
        // Predicated region
        $region67: #{_lambda_.2} parent=57 // pred_check
          %p243 = pneg %p67
        $region68: #{_lambda_.2} parent=57 // pred_check_branch
          %245 = sbr.rel (%p243) target = $region70
        $region69: #{_lambda_.2} parent=57 // pred_region
          _
        $region70: #{_lambda_.2} parent=57 // pred_fallthru
          _
        // Predicated region
        $region71: #{_lambda_.2} parent=57 // pred_check
          %p246 = pneg %p88
        $region72: #{_lambda_.2} parent=57 // pred_check_branch
          %248 = sbr.rel (%p246) target = $region74
        $region73: #{_lambda_.2} parent=57 // pred_region
          _
        $region74: #{_lambda_.2} parent=57 // pred_fallthru
          _
        // Predicated region
        $region75: #{_lambda_.2} parent=57 // pred_check
          %p249 = pneg %p67
        $region76: #{_lambda_.2} parent=57 // pred_check_branch
          %251 = sbr.rel (%p249) target = $region78
        $region77: #{_lambda_.2} parent=57 // pred_region
          _
        $region78: #{_lambda_.2} parent=57 // pred_fallthru
          _
        // Predicated region
        $region79: #{_lambda_.2} parent=57 // pred_check
          %p252 = pneg %p88
        $region80: #{_lambda_.2} parent=57 // pred_check_branch
          %254 = sbr.rel (%p252) target = $region82
        $region81: #{_lambda_.2} parent=57 // pred_region
          _
        $region82: #{_lambda_.2} parent=57 // pred_fallthru
          _
      $region58: #{_lambda_.2} parent=5 // pred_fallthru
        _
      %p255 = scmp.le.s32.totalorder 2, %s9
      // Predicated region
      $region83: #{_lambda_.2} parent=5 // pred_check
        %p256 = pneg %p255
      $region84: #{_lambda_.2} parent=5 // pred_check_branch
        %258 = sbr.rel (%p256) target = $region86
      $region85: #{_lambda_.2} parent=5 // pred_region
        %s259 = ssub.s32 %s9, 2
      $region86: #{_lambda_.2} parent=5 // pred_fallthru
        _
    $region6: #{_lambda_.2} parent=1 // loop_footer
      %s13 = sadd.s32 1, %s9
    $region7: #{_lambda_.2} parent=1 // loop_footer_branch
      %8 = sbr.rel target = $region3
    $region8: #{_lambda_.2} parent=1 // loop_exit
      _

// kernel: _lambda_.3
$region0: #{_lambda_.3}
  #allocation0 [shape = 'u32[]', space=smem, size = 0x4, offset = 0x4, fixed_abs, tag = 'smem constant byte address 0x4 - core index']
  #allocation1 [shape = 'u32[72,128]{1,0:T(1,128)}', space=vmem, size = 0x9000, scoped, tag = 'internal scratch']
  %s0 = inlined_call_operand.vmem [shape: f32[2,13,256], index: 0, kind: input, shape index: {}]
  %s1 = inlined_call_operand.vmem [shape: f32[13,13], index: 1, kind: input, shape index: {}]
  %s2 = inlined_call_operand.vmem [shape: f32[13,1], index: 2, kind: input, shape index: {}]
  %s3 = inlined_call_operand.vmem [shape: f32[13,13], index: 3, kind: input, shape index: {}]
  %s4 = inlined_call_operand.vmem [shape: f32[13,1], index: 4, kind: input, shape index: {}]
  %s5 = inlined_call_operand.vmem [shape: f32[2,13,256], index: 5, kind: output, shape index: {}]
  %s6 = sld [smem:[#allocation0]]
  $region125: #{_lambda_.3} parent=0
    _
  %s8 = ssub.s32 1, %s6
  %s9 = scalar_select 0, %s8, %s6
  $region1: #{_lambda_.3} parent=0
    #allocation2 [shape = 'u8[16384]{0}', space=vmem, size = 0x4000, scoped, tag = 'input window, operand 0']
    #allocation3 [shape = 'u8[16384]{0}', space=vmem, size = 0x4000, scoped, tag = 'output window, operand 0']
    loop: start=0, step=1, limit=6
    $region2: #{_lambda_.3} parent=1 // loop_pre_header
      _
    $region3: #{_lambda_.3} parent=1 // loop_header
      %s11 = sphi 0, %s15
      %p12 = scmp.ge.s32.totalorder %s11, 6
      %s18 = sphi 0, %s30
      %s19 = sphi 0, %s26
      %s20 = sphi 0, %s18
      %s21 = sphi 0, %s19
      %s22 = sphi 0, %s20
      %s23 = sphi 0, %s21
      %s35 = sphi 0, %s37
      %s38 = sphi 0, %s35
      %s39 = sphi 0, %s38
      %s55 = sphi 0, %s39
      %s59 = sphi 0, %s59
      %s61 = sphi 0, %s59
      %s62 = sphi 0, %s61
      %s76 = sphi 0, %s62
      %s80 = sphi 0, %s80
      %s82 = sphi 0, %s80
      %s83 = sphi 0, %s82
      %s97 = sphi 0, %s83
      %s101 = sphi 0, %s101
      %s103 = sphi 0, %s101
      %s104 = sphi 0, %s103
      %s118 = sphi 0, %s104
      %s122 = sphi 0, %s122
      %s124 = sphi 0, %s122
      %s125 = sphi 0, %s124
      %s139 = sphi 0, %s125
      %s147 = sphi 0, %s149
      %s150 = sphi 0, %s147
      %s151 = sphi 0, %s150
      %s167 = sphi 0, %s151
    $region4: #{_lambda_.3} parent=1 // loop_header_branch
      %14 = sbr.rel (%p12) target = $region8
    $region5: #{_lambda_.3} parent=1 // loop_body
      %s16 = ssub.s32 %s11, 1
      %s17 = ssub.s32 %s11, 2
      %s24 = sadd.s32 1, %s19
      %p25 = scmp.ge.s32.totalorder %s24, 2
      %s26 = scalar_select %p25, 0, %s24
      %s27 = sadd.s32 1, %s18
      %s28 = scalar_select %p25, %s27, %s18
      %p29 = scmp.ge.s32.totalorder %s28, 2
      %s30 = scalar_select %p29, 0, %s28
      %s31 = ssub.s32 %s18, %s30
      %s32 = ssub.s32 %s19, %s26
      %s33 = sor.u32 %s31, %s32
      %p34 = scmp.eq.s32.totalorder %s33, 0
      %s36 = sadd.s32 %s35, 1
      %s37 = scalar_select %p34, %s35, %s36
      %p40 = pneg %p34
      %p41 = scmp.eq.s32.totalorder %s11, 3
      %p42 = por %p40, %p41
      %p43 = scmp.ne.s32.totalorder %s35, %s38
      %p44 = scmp.eq.s32.totalorder %s11, 0
      %p45 = por %p43, %p44
      %p46 = scmp.ne.s32.totalorder %s35, %s38
      %p47 = scmp.eq.s32.totalorder %s16, 3
      %p48 = por %p46, %p47
      %p49 = scmp.ne.s32.totalorder %s38, %s39
      %p50 = scmp.eq.s32.totalorder %s16, 0
      %p51 = por %p49, %p50
      %p52 = scmp.ne.s32.totalorder %s38, %s39
      %p53 = scmp.eq.s32.totalorder %s17, 3
      %p54 = por %p52, %p53
      %p56 = scmp.ne.s32.totalorder %s39, %s55
      %p57 = scmp.eq.s32.totalorder %s17, 0
      %p58 = por %p56, %p57
      %s60 = sadd.s32 %s59, 1
      %p63 = scmp.eq.s32.totalorder %s11, 3
      %p64 = scmp.ne.s32.totalorder %s59, %s61
      %p65 = scmp.eq.s32.totalorder %s11, 0
      %p66 = por %p64, %p65
      %p67 = scmp.ne.s32.totalorder %s59, %s61
      %p68 = scmp.eq.s32.totalorder %s16, 3
      %p69 = por %p67, %p68
      %p70 = scmp.ne.s32.totalorder %s61, %s62
      %p71 = scmp.eq.s32.totalorder %s16, 0
      %p72 = por %p70, %p71
      %p73 = scmp.ne.s32.totalorder %s61, %s62
      %p74 = scmp.eq.s32.totalorder %s17, 3
      %p75 = por %p73, %p74
      %p77 = scmp.ne.s32.totalorder %s62, %s76
      %p78 = scmp.eq.s32.totalorder %s17, 0
      %p79 = por %p77, %p78
      %s81 = sadd.s32 %s80, 1
      %p84 = scmp.eq.s32.totalorder %s11, 3
      %p85 = scmp.ne.s32.totalorder %s80, %s82
      %p86 = scmp.eq.s32.totalorder %s11, 0
      %p87 = por %p85, %p86
      %p88 = scmp.ne.s32.totalorder %s80, %s82
      %p89 = scmp.eq.s32.totalorder %s16, 3
      %p90 = por %p88, %p89
      %p91 = scmp.ne.s32.totalorder %s82, %s83
      %p92 = scmp.eq.s32.totalorder %s16, 0
      %p93 = por %p91, %p92
      %p94 = scmp.ne.s32.totalorder %s82, %s83
      %p95 = scmp.eq.s32.totalorder %s17, 3
      %p96 = por %p94, %p95
      %p98 = scmp.ne.s32.totalorder %s83, %s97
      %p99 = scmp.eq.s32.totalorder %s17, 0
      %p100 = por %p98, %p99
      %s102 = sadd.s32 %s101, 1
      %p105 = scmp.eq.s32.totalorder %s11, 3
      %p106 = scmp.ne.s32.totalorder %s101, %s103
      %p107 = scmp.eq.s32.totalorder %s11, 0
      %p108 = por %p106, %p107
      %p109 = scmp.ne.s32.totalorder %s101, %s103
      %p110 = scmp.eq.s32.totalorder %s16, 3
      %p111 = por %p109, %p110
      %p112 = scmp.ne.s32.totalorder %s103, %s104
      %p113 = scmp.eq.s32.totalorder %s16, 0
      %p114 = por %p112, %p113
      %p115 = scmp.ne.s32.totalorder %s103, %s104
      %p116 = scmp.eq.s32.totalorder %s17, 3
      %p117 = por %p115, %p116
      %p119 = scmp.ne.s32.totalorder %s104, %s118
      %p120 = scmp.eq.s32.totalorder %s17, 0
      %p121 = por %p119, %p120
      %s123 = sadd.s32 %s122, 1
      %p126 = scmp.eq.s32.totalorder %s11, 3
      %p127 = scmp.ne.s32.totalorder %s122, %s124
      %p128 = scmp.eq.s32.totalorder %s11, 0
      %p129 = por %p127, %p128
      %p130 = scmp.ne.s32.totalorder %s122, %s124
      %p131 = scmp.eq.s32.totalorder %s16, 3
      %p132 = por %p130, %p131
      %p133 = scmp.ne.s32.totalorder %s124, %s125
      %p134 = scmp.eq.s32.totalorder %s16, 0
      %p135 = por %p133, %p134
      %p136 = scmp.ne.s32.totalorder %s124, %s125
      %p137 = scmp.eq.s32.totalorder %s17, 3
      %p138 = por %p136, %p137
      %p140 = scmp.ne.s32.totalorder %s125, %s139
      %p141 = scmp.eq.s32.totalorder %s17, 0
      %p142 = por %p140, %p141
      %s143 = ssub.s32 %s18, %s30
      %s144 = ssub.s32 %s19, %s26
      %s145 = sor.u32 %s143, %s144
      %p146 = scmp.eq.s32.totalorder %s145, 0
      %s148 = sadd.s32 %s147, 1
      %s149 = scalar_select %p146, %s147, %s148
      %p152 = pneg %p146
      %p153 = scmp.eq.s32.totalorder %s11, 3
      %p154 = por %p152, %p153
      %p155 = scmp.ne.s32.totalorder %s147, %s150
      %p156 = scmp.eq.s32.totalorder %s11, 0
      %p157 = por %p155, %p156
      %p158 = scmp.ne.s32.totalorder %s147, %s150
      %p159 = scmp.eq.s32.totalorder %s16, 3
      %p160 = por %p158, %p159
      %p161 = scmp.ne.s32.totalorder %s150, %s151
      %p162 = scmp.eq.s32.totalorder %s16, 0
      %p163 = por %p161, %p162
      %p164 = scmp.ne.s32.totalorder %s150, %s151
      %p165 = scmp.eq.s32.totalorder %s17, 3
      %p166 = por %p164, %p165
      %p168 = scmp.ne.s32.totalorder %s151, %s167
      %p169 = scmp.eq.s32.totalorder %s17, 0
      %p170 = por %p168, %p169
      %p171 = scmp.le.s32.totalorder 1, %s11
      %p172 = scmp.lt.s32.totalorder %s11, 5
      %p173 = pnand %p171, %p172
      %p174 = pneg %p173
      // Predicated region
      $region9: #{_lambda_.3} parent=5 // pred_check
        _
      $region10: #{_lambda_.3} parent=5 // pred_check_branch
        %176 = sbr.rel (%p173) target = $region12
      $region11: #{_lambda_.3} parent=5 // pred_region
        %s177 = ssub.s32 %s11, 1
        // Predicated region
        $region13: #{_lambda_.3} parent=11 // pred_check
          %p178 = pneg %p72
        $region14: #{_lambda_.3} parent=11 // pred_check_branch
          %180 = sbr.rel (%p178) target = $region16
        $region15: #{_lambda_.3} parent=11 // pred_region
          _
        $region16: #{_lambda_.3} parent=11 // pred_fallthru
          _
        // Predicated region
        $region17: #{_lambda_.3} parent=11 // pred_check
          %p181 = pneg %p93
        $region18: #{_lambda_.3} parent=11 // pred_check_branch
          %183 = sbr.rel (%p181) target = $region20
        $region19: #{_lambda_.3} parent=11 // pred_region
          _
        $region20: #{_lambda_.3} parent=11 // pred_fallthru
          _
        // Predicated region
        $region21: #{_lambda_.3} parent=11 // pred_check
          %p184 = pneg %p114
        $region22: #{_lambda_.3} parent=11 // pred_check_branch
          %186 = sbr.rel (%p184) target = $region24
        $region23: #{_lambda_.3} parent=11 // pred_region
          _
        $region24: #{_lambda_.3} parent=11 // pred_fallthru
          _
        // Predicated region
        $region25: #{_lambda_.3} parent=11 // pred_check
          %p187 = pneg %p135
        $region26: #{_lambda_.3} parent=11 // pred_check_branch
          %189 = sbr.rel (%p187) target = $region28
        $region27: #{_lambda_.3} parent=11 // pred_region
          _
        $region28: #{_lambda_.3} parent=11 // pred_fallthru
          _
      $region12: #{_lambda_.3} parent=5 // pred_fallthru
        _
      %p190 = scmp.lt.s32.totalorder %s11, 4
      // Predicated region
      $region29: #{_lambda_.3} parent=5 // pred_check
        %p191 = pneg %p190
      $region30: #{_lambda_.3} parent=5 // pred_check_branch
        %193 = sbr.rel (%p191) target = $region32
      $region31: #{_lambda_.3} parent=5 // pred_region
        // Predicated region
        $region33: #{_lambda_.3} parent=31 // pred_check
          %p194 = pneg %p45
        $region34: #{_lambda_.3} parent=31 // pred_check_branch
          %196 = sbr.rel (%p194) target = $region36
        $region35: #{_lambda_.3} parent=31 // pred_region
          %s197 = sand.u32 %s35, 1
          %s198 = sand.u32 %s35, 1
          %s199 = smul.addr %s198, 16
          %s200 = scalar_lea.vmem [#allocation2], %s199
          %s201 = smul.addr %s18, 4
          %s202 = sadd.s32 %s19, %s201
          %s203 = smul.addr %s202, 8
          %s204 = scalar_lea.vmem %s0, %s203
          // Predicated region
          $region37: #{_lambda_.3} parent=35 // pred_check
            _
          $region38: #{_lambda_.3} parent=35 // pred_check_branch
            %206 = sbr.rel (0) target = $region40
          $region39: #{_lambda_.3} parent=35 // pred_region
            // Predicated region
            $region41: #{_lambda_.3} parent=39 // pred_check
              _
            $region42: #{_lambda_.3} parent=39 // pred_check_branch
              %208 = sbr.rel (0) target = $region44
            $region43: #{_lambda_.3} parent=39 // pred_region
              // Predicated region
              $region56: #{_lambda_.3} parent=43 // pred_check
                _
              $region57: #{_lambda_.3} parent=43 // pred_check_branch
                %226 = sbr.rel (0) target = $region59
              $region58: #{_lambda_.3} parent=43 // pred_region
                loop: start=0, step=1, limit=1
                $region60: #{_lambda_.3} parent=58 // loop_pre_header
                  _
                $region61: #{_lambda_.3} parent=58 // loop_header
                  %s228 = sphi 0, %s232
                  %p229 = scmp.ge.s32.totalorder %s228, 1
                  %s233 = sphi %s204, %s204
                  %s234 = sphi %s200, %s200
                $region62: #{_lambda_.3} parent=58 // loop_header_branch
                  %231 = sbr.rel (%p229) target = $region66
                $region63: #{_lambda_.3} parent=58 // loop_body
                  %v235 = vld [vmem:[%s233] sm:$0xff]
                  %236 = vst [vmem:[%s234] sm:$0xff] %v235
                  %v237 = vld [vmem:[%s233 + $0x10] sm:$0xff]
                  %238 = vst [vmem:[%s234 + $0x8] sm:$0xff] %v237
                $region64: #{_lambda_.3} parent=58 // loop_footer
                  %s232 = sadd.s32 1, %s228
                $region65: #{_lambda_.3} parent=58 // loop_footer_branch
                  %227 = sbr.rel target = $region61
                $region66: #{_lambda_.3} parent=58 // loop_exit
                  _
              $region59: #{_lambda_.3} parent=43 // pred_fallthru
                _
              // Predicated region
              $region67: #{_lambda_.3} parent=43 // pred_check
                _
              $region68: #{_lambda_.3} parent=43 // pred_check_branch
                %240 = sbr.rel target = $region70
              $region69: #{_lambda_.3} parent=43 // pred_region
                _
              $region70: #{_lambda_.3} parent=43 // pred_fallthru
                _
            $region44: #{_lambda_.3} parent=39 // pred_fallthru
              _
            // Predicated region
            $region45: #{_lambda_.3} parent=39 // pred_check
              _
            $region46: #{_lambda_.3} parent=39 // pred_check_branch
              %210 = sbr.rel target = $region48
            $region47: #{_lambda_.3} parent=39 // pred_region
              %s212 = ssub.s32 256, 1
              loop: start=0, step=1, limit=1
              $region49: #{_lambda_.3} parent=47 // loop_pre_header
                _
              $region50: #{_lambda_.3} parent=47 // loop_header
                %s214 = sphi 0, %s218
                %p215 = scmp.ge.s32.totalorder %s214, 1
                %s219 = sphi %s204, %s204
                %s220 = sphi %s200, %s200
              $region51: #{_lambda_.3} parent=47 // loop_header_branch
                %217 = sbr.rel (%p215) target = $region55
              $region52: #{_lambda_.3} parent=47 // loop_body
                %v221 = vld [vmem:[%s219] sm:%s212]
                %222 = vst [vmem:[%s220] sm:%s212] %v221
                %v223 = vld [vmem:[%s219 + $0x10] sm:%s212]
                %224 = vst [vmem:[%s220 + $0x8] sm:%s212] %v223
              $region53: #{_lambda_.3} parent=47 // loop_footer
                %s218 = sadd.s32 1, %s214
              $region54: #{_lambda_.3} parent=47 // loop_footer_branch
                %213 = sbr.rel target = $region50
              $region55: #{_lambda_.3} parent=47 // loop_exit
                _
            $region48: #{_lambda_.3} parent=39 // pred_fallthru
              _
          $region40: #{_lambda_.3} parent=35 // pred_fallthru
            _
          %241 = vnop
        $region36: #{_lambda_.3} parent=31 // pred_fallthru
          _
      $region32: #{_lambda_.3} parent=5 // pred_fallthru
        _
      %p242 = scmp.le.s32.totalorder 1, %s11
      %p243 = scmp.lt.s32.totalorder %s11, 5
      %p244 = pnand %p242, %p243
      %p245 = pneg %p244
      // Predicated region
      $region71: #{_lambda_.3} parent=5 // pred_check
        _
      $region72: #{_lambda_.3} parent=5 // pred_check_branch
        %247 = sbr.rel (%p244) target = $region74
      $region73: #{_lambda_.3} parent=5 // pred_region
        %s248 = ssub.s32 %s11, 1
        %s249 = sand.u32 %s38, 1
        %s250 = sand.u32 %s38, 1
        %s251 = smul.addr %s250, 16
        %s252 = scalar_lea.vmem [#allocation2], %s251
        // Predicated region
        $region75: #{_lambda_.3} parent=73 // pred_check
          %p253 = pneg %p51
        $region76: #{_lambda_.3} parent=73 // pred_check_branch
          %255 = sbr.rel (%p253) target = $region78
        $region77: #{_lambda_.3} parent=73 // pred_region
          _
        $region78: #{_lambda_.3} parent=73 // pred_fallthru
          _
        %s256 = sand.u32 %s38, 1
        %s257 = sand.u32 %s38, 1
        %s258 = smul.addr %s257, 16
        %s259 = scalar_lea.vmem [#allocation2], %s258
        %p260 = pneg %p51
        %p261 = pneg %p48
        %p262 = pneg %p72
        %p263 = pneg %p69
        %p264 = pneg %p93
        %p265 = pneg %p90
        %p266 = pneg %p114
        %p267 = pneg %p111
        %p268 = pneg %p135
        %p269 = pneg %p132
        %p270 = pneg %p163
        %p271 = pneg %p160
        %s272 = sand.u32 %s150, 1
        %s273 = sand.u32 %s150, 1
        %s274 = smul.addr %s273, 16
        %s275 = scalar_lea.vmem [#allocation3], %s274
        %v276 = vld [vmem:[%s252] sm:$0xff]
        %v277 = vld [vmem:[%s252 + $0x8] sm:$0x1f]
        %v278 = vld [vmem:[%s1] sm:$0xff]
        %v279 = vld [vmem:[%s1 + $0x8] sm:$0x1f]
        %v280 = vld [vmem:[%s2] sm:$0xff]
        %v281 = vld [vmem:[%s2 + $0x8] sm:$0x1f]
        %283 = vset.pattern.permute.xlu0 0
        %284 = vperm.xlu0 %283, %v280
        %v285 = vpop.permute.xlu0 %284
        %288 = vset.pattern.permute.xlu0 0
        %289 = vperm.xlu0 %288, %v281
        %v290 = vpop.permute.xlu0 %289
        %vm292 = vcmask 105472
        %v294 = vsel %vm292, %v278, 0
        %v297 = vsel %vm292, %v279, 0
        %vm299 = vcmask 1044480
        %v301 = vsel %vm299, %v277, 0
        %303 = vmatpush.msra.mxu0 0.0
        %304 = vmatpush.msra.mxu0 0.0
        %305 = vmatpush.msra.mxu0 0.0
        %306 = vmatpush.msra.mxu0 0.0
        %307 = vmatpush.msra.mxu0 0.0
        %308 = vmatpush.msra.mxu0 0.0
        %309 = vmatpush.msra.mxu0 0.0
        %310 = vmatpush.msra.mxu0 0.0
        %311 = vmatpush.msra.mxu0 0.0
        %312 = vmatpush.msra.mxu0 0.0
        %313 = vmatpush.msra.mxu0 0.0
        %314 = vmatpush.msra.mxu0 0.0
        %315 = vmatpush.msra.mxu0 0.0
        %316 = vmatpush.msra.mxu0 0.0
        %317 = vmatpush.msra.mxu0 %v301
        %318 = vmatpush.msra.mxu0 %v276
        %319 = vmatmul.f32.gmra.mxu0 %v294
        %v320 = vpop.f32.mrf.mxu0
        %v321 = vadd.f32 %v285, %v320
        %322 = vmatmul.f32.gmra.mxu0 %v297
        %v323 = vpop.f32.mrf.mxu0
        %v324 = vadd.f32 %v290, %v323
        %325 = vdwg.mxu0
        %v326 = vld [vmem:[%s3] sm:$0xff]
        %v327 = vld [vmem:[%s3 + $0x8] sm:$0x1f]
        %v328 = vld [vmem:[%s4] sm:$0xff]
        %v329 = vld [vmem:[%s4 + $0x8] sm:$0x1f]
        %331 = vset.pattern.permute.xlu0 0
        %332 = vperm.xlu0 %331, %v328
        %v333 = vpop.permute.xlu0 %332
        %336 = vset.pattern.permute.xlu0 0
        %337 = vperm.xlu0 %336, %v329
        %v338 = vpop.permute.xlu0 %337
        %v341 = vsel %vm292, %v326, 0
        %v344 = vsel %vm292, %v327, 0
        %346 = vmatpush.msra.mxu0 0.0
        %347 = vmatpush.msra.mxu0 0.0
        %348 = vmatpush.msra.mxu0 0.0
        %349 = vmatpush.msra.mxu0 0.0
        %350 = vmatpush.msra.mxu0 0.0
        %351 = vmatpush.msra.mxu0 0.0
        %352 = vmatpush.msra.mxu0 0.0
        %353 = vmatpush.msra.mxu0 0.0
        %354 = vmatpush.msra.mxu0 0.0
        %355 = vmatpush.msra.mxu0 0.0
        %356 = vmatpush.msra.mxu0 0.0
        %357 = vmatpush.msra.mxu0 0.0
        %358 = vmatpush.msra.mxu0 0.0
        %359 = vmatpush.msra.mxu0 0.0
        %360 = vmatpush.msra.mxu0 %v301
        %361 = vmatpush.msra.mxu0 %v276
        %362 = vmatmul.f32.gmra.mxu0 %v341
        %v363 = vpop.f32.mrf.mxu0
        %v364 = vadd.f32 %v333, %v363
        %365 = vmatmul.f32.gmra.mxu0 %v344
        %v366 = vpop.f32.mrf.mxu0
        %v367 = vadd.f32 %v338, %v366
        %368 = vdwg.mxu0
        %v369 = vmax.f32 %v321, 0.0
        %v370 = vmax.f32 %v324, 0.0
        %v371 = vadd.f32 %v369, %v364
        %v372 = vadd.f32 %v370, %v367
        %373 = vst [vmem:[%s275] sm:$0xff] %v371
        %374 = vst [vmem:[%s275 + $0x8] sm:$0x1f] %v372
        %s375 = sand.u32 %s150, 1
        %s376 = sand.u32 %s150, 1
        %s377 = smul.addr %s376, 16
        %s378 = scalar_lea.vmem [#allocation3], %s377
        // Predicated region
        $region79: #{_lambda_.3} parent=73 // pred_check
          %p379 = pneg %p160
        $region80: #{_lambda_.3} parent=73 // pred_check_branch
          %381 = sbr.rel (%p379) target = $region82
        $region81: #{_lambda_.3} parent=73 // pred_region
          %s382 = smul.addr %s20, 4
          %s383 = sadd.s32 %s21, %s382
          %s384 = smul.addr %s383, 8
          %s385 = scalar_lea.vmem %s5, %s384
          // Predicated region
          $region83: #{_lambda_.3} parent=81 // pred_check
            _
          $region84: #{_lambda_.3} parent=81 // pred_check_branch
            %387 = sbr.rel (0) target = $region86
          $region85: #{_lambda_.3} parent=81 // pred_region
            // Predicated region
            $region87: #{_lambda_.3} parent=85 // pred_check
              _
            $region88: #{_lambda_.3} parent=85 // pred_check_branch
              %389 = sbr.rel (0) target = $region90
            $region89: #{_lambda_.3} parent=85 // pred_region
              // Predicated region
              $region102: #{_lambda_.3} parent=89 // pred_check
                _
              $region103: #{_lambda_.3} parent=89 // pred_check_branch
                %407 = sbr.rel (0) target = $region105
              $region104: #{_lambda_.3} parent=89 // pred_region
                loop: start=0, step=1, limit=1
                $region106: #{_lambda_.3} parent=104 // loop_pre_header
                  _
                $region107: #{_lambda_.3} parent=104 // loop_header
                  %s409 = sphi 0, %s413
                  %p410 = scmp.ge.s32.totalorder %s409, 1
                  %s414 = sphi %s378, %s378
                  %s415 = sphi %s385, %s385
                $region108: #{_lambda_.3} parent=104 // loop_header_branch
                  %412 = sbr.rel (%p410) target = $region112
                $region109: #{_lambda_.3} parent=104 // loop_body
                  %v416 = vld [vmem:[%s414] sm:$0xff]
                  %417 = vst [vmem:[%s415] sm:$0xff] %v416
                  %v418 = vld [vmem:[%s414 + $0x8] sm:$0xff]
                  %419 = vst [vmem:[%s415 + $0x10] sm:$0xff] %v418
                $region110: #{_lambda_.3} parent=104 // loop_footer
                  %s413 = sadd.s32 1, %s409
                $region111: #{_lambda_.3} parent=104 // loop_footer_branch
                  %408 = sbr.rel target = $region107
                $region112: #{_lambda_.3} parent=104 // loop_exit
                  _
              $region105: #{_lambda_.3} parent=89 // pred_fallthru
                _
              // Predicated region
              $region113: #{_lambda_.3} parent=89 // pred_check
                _
              $region114: #{_lambda_.3} parent=89 // pred_check_branch
                %421 = sbr.rel target = $region116
              $region115: #{_lambda_.3} parent=89 // pred_region
                _
              $region116: #{_lambda_.3} parent=89 // pred_fallthru
                _
            $region90: #{_lambda_.3} parent=85 // pred_fallthru
              _
            // Predicated region
            $region91: #{_lambda_.3} parent=85 // pred_check
              _
            $region92: #{_lambda_.3} parent=85 // pred_check_branch
              %391 = sbr.rel target = $region94
            $region93: #{_lambda_.3} parent=85 // pred_region
              %s393 = ssub.s32 256, 1
              loop: start=0, step=1, limit=1
              $region95: #{_lambda_.3} parent=93 // loop_pre_header
                _
              $region96: #{_lambda_.3} parent=93 // loop_header
                %s395 = sphi 0, %s399
                %p396 = scmp.ge.s32.totalorder %s395, 1
                %s400 = sphi %s378, %s378
                %s401 = sphi %s385, %s385
              $region97: #{_lambda_.3} parent=93 // loop_header_branch
                %398 = sbr.rel (%p396) target = $region101
              $region98: #{_lambda_.3} parent=93 // loop_body
                %v402 = vld [vmem:[%s400] sm:%s393]
                %403 = vst [vmem:[%s401] sm:%s393] %v402
                %v404 = vld [vmem:[%s400 + $0x8] sm:%s393]
                %405 = vst [vmem:[%s401 + $0x10] sm:%s393] %v404
              $region99: #{_lambda_.3} parent=93 // loop_footer
                %s399 = sadd.s32 1, %s395
              $region100: #{_lambda_.3} parent=93 // loop_footer_branch
                %394 = sbr.rel target = $region96
              $region101: #{_lambda_.3} parent=93 // loop_exit
                _
            $region94: #{_lambda_.3} parent=85 // pred_fallthru
              _
          $region86: #{_lambda_.3} parent=81 // pred_fallthru
            _
          %422 = vnop
        $region82: #{_lambda_.3} parent=73 // pred_fallthru
          _
      $region74: #{_lambda_.3} parent=5 // pred_fallthru
        _
      %p423 = scmp.le.s32.totalorder 2, %s11
      // Predicated region
      $region117: #{_lambda_.3} parent=5 // pred_check
        %p424 = pneg %p423
      $region118: #{_lambda_.3} parent=5 // pred_check_branch
        %426 = sbr.rel (%p424) target = $region120
      $region119: #{_lambda_.3} parent=5 // pred_region
        %s427 = ssub.s32 %s11, 2
        // Predicated region
        $region121: #{_lambda_.3} parent=119 // pred_check
          %p428 = pneg %p166
        $region122: #{_lambda_.3} parent=119 // pred_check_branch
          %430 = sbr.rel (%p428) target = $region124
        $region123: #{_lambda_.3} parent=119 // pred_region
          %s431 = sand.u32 %s151, 1
          %s432 = sand.u32 %s151, 1
          %s433 = smul.addr %s432, 16
          %s434 = scalar_lea.vmem [#allocation3], %s433
        $region124: #{_lambda_.3} parent=119 // pred_fallthru
          _
      $region120: #{_lambda_.3} parent=5 // pred_fallthru
        _
    $region6: #{_lambda_.3} parent=1 // loop_footer
      %s15 = sadd.s32 1, %s11
    $region7: #{_lambda_.3} parent=1 // loop_footer_branch
      %10 = sbr.rel target = $region3
    $region8: #{_lambda_.3} parent=1 // loop_exit
      _

</llo_original>
